<compile_context>
chip_gen: v5e
topology: v5e:2x2
jax: 0.10.0
libtpu: 0.0.40
codegen_flags: <defaults>
</compile_context>

<pallas_src>
import functools

import jax
import jax.numpy as jnp
from jax.experimental import pallas as pl
from jax.experimental.pallas import tpu as pltpu


# ------------------------------ Pallas kernel --------------------------------

def self_attention_kernel(enc_ref, w1_ref, b1_ref, w2_ref, b2_ref,
                          out_ref, wts_ref):
    """Fused SelfAttention for one batch block.

    enc_ref: (Bb, T, H)  f32   encoder outputs
    w1_ref:  (H, Hh)     bf16  projection Linear 1 weight (pre-transposed)
    b1_ref:  (1, Hh)     f32   projection Linear 1 bias
    w2_ref:  (1, Hh)     f32   projection Linear 2 weight (single output row)
    b2_ref:  (1, 1)      f32   projection Linear 2 bias (SMEM scalar)
    out_ref: (Bb, Hp)    f32   attention-pooled outputs (Hp >= H, lane-padded)
    wts_ref: (Bb, Tp)    f32   softmax attention weights (Tp >= T, lane-padded)
    """
    Bb, T, H = enc_ref.shape
    Hh = w1_ref.shape[1]
    Hp = out_ref.shape[1]
    Tp = wts_ref.shape[1]

    x = enc_ref[...]                                        # (Bb, T, H) f32

    # --- projection MLP: one big MXU matmul, bf16 operands / f32 accumulation.
    if T % 8 == 0:
        # Sublane-aligned merge of the leading dims: no hidden relayout copy.
        x2d = x.reshape(Bb * T, H)
        hid = jnp.dot(x2d.astype(jnp.bfloat16), w1_ref[...],
                      preferred_element_type=jnp.float32)   # (Bb*T, Hh) f32
        hid = jnp.maximum(hid + b1_ref[...], 0.0)           # ReLU in f32
        hid3 = hid.reshape(Bb, T, Hh)
    else:
        # TODO(synk): for production shapes with T % 8 != 0, pad T on the
        # wrapper side; the 3-D contraction below avoids the per-step relayout
        # but lowers to smaller per-batch matmuls.
        hid3 = jax.lax.dot_general(
            x.astype(jnp.bfloat16), w1_ref[...],
            dimension_numbers=(((2,), (0,)), ((), ())),
            preferred_element_type=jnp.float32)              # (Bb, T, Hh) f32
        hid3 = jnp.maximum(hid3 + b1_ref[...].reshape(1, 1, Hh), 0.0)

    # --- energy + softmax: lane-dense (Bb, T), all f32 on the VPU/EUP --------
    w2 = w2_ref[...].reshape(1, 1, Hh)
    energy = jnp.sum(hid3 * w2, axis=-1) + b2_ref[0, 0]     # (Bb, T)
    m = jnp.max(energy, axis=-1, keepdims=True)             # (Bb, 1)
    p = jnp.exp(energy - m)                                 # (Bb, T)
    denom = jnp.sum(p, axis=-1, keepdims=True)              # (Bb, 1)
    wts = p / denom               # exact divide: rows sum to 1 (reviewer note)

    # --- weighted pooling over time ------------------------------------------
    if T >= 128 and H >= 128:
        # Large tiles: VPU broadcast-multiply + sublane (XLU) reduce over T.
        # Avoids Bb independent M=1 MXU matmuls and keeps the MXU free for the
        # projection of the next block.
        pooled = jnp.sum(x * wts[:, :, None], axis=1)        # (Bb, H) f32
    else:
        # Small tiles: batched matmul; the M=1 MXU cost is negligible here and
        # this formulation is layout-friendly (T stays on lanes).
        pooled = jnp.einsum('bqt,bth->bqh', wts.reshape(Bb, 1, T), x,
                            preferred_element_type=jnp.float32).reshape(Bb, H)

    # --- lane-dense stores (padding branch only taken for production shapes
    # where the wrapper chose Hp/Tp > H/T) -------------------------------------
    if Hp > H:
        pooled = jnp.concatenate(
            [pooled, jnp.zeros((Bb, Hp - H), pooled.dtype)], axis=-1)
    if Tp > T:
        wts = jnp.concatenate(
            [wts, jnp.zeros((Bb, Tp - T), wts.dtype)], axis=-1)
    out_ref[...] = pooled
    wts_ref[...] = wts


# -------------------------------- sizing helpers ------------------------------

def _round_up(x, m):
    return ((x + m - 1) // m) * m


def _pick_vmem_limit_bytes():
    """Generation-aware scoped-VMEM limit (~5/8 of physical capacity, capped):
    v5e/v6e (128 MiB physical) -> 80 MiB, v7x (64 MiB per TC) -> 40 MiB."""
    try:
        cap = int(pltpu.get_tpu_info().vmem_capacity_bytes)
    except Exception:
        cap = 64 * 1024 * 1024          # conservative (v7x-sized) fallback
    return int(min(cap * 5 // 8, 80 * 1024 * 1024))


def _lane_pad(n, enc_row_bytes):
    """Round an output lane dim up to a multiple of 128 (unmasked vst) unless
    the extra HBM writeback would exceed ~1/8 of the per-row enc read traffic
    (at tiny T/H the extra DMA bytes outweigh the store-slot win)."""
    n_pad = _round_up(n, 128)
    if n_pad == n:
        return n
    if (n_pad - n) * 4 * 8 > enc_row_bytes:
        return n
    return n_pad


def _pick_batch_block(B, T, H, Hh, Hp, Tp, vmem_limit_bytes):
    """Largest multiple-of-8 batch block that fits the double-buffered working
    set in the scoped-VMEM budget, capped so the grid has >= 2 steps."""
    if B <= 8:
        return B
    budget = (vmem_limit_bytes * 2) // 3        # headroom for compiler scratch
    weight_bytes = 2 * (2 * H * Hh + 4 * Hh + 4 * Hh)   # dbl-buffered bf16 w1 + f32 b1/w2
    per_row = (
        2 * 4 * T * H           # f32 enc block, double-buffered
        + 2 * T * H             # in-kernel bf16 copy of the block
        + 4 * T * Hh            # f32 hidden activations
        + 2 * 4 * (Hp + Tp)     # output blocks, double-buffered
    )
    bb = (budget - weight_bytes) // max(per_row, 1)
    bb = max(8, (bb // 8) * 8)
    # Keep >= 2 grid steps so the "parallel" batch axis can shard across v7x's
    # two TensorCores (no-op on single-TC v5e/v6e).
    bb = min(bb, _round_up(pl.cdiv(B, 2), 8))
    return int(min(B, bb))


# ---------------------------------- wrapper -----------------------------------

@functools.partial(jax.jit, static_argnames=("batch_block", "vmem_limit_bytes"))
def _self_attention_impl(enc, w1t, b1, w2, b2, *, batch_block, vmem_limit_bytes):
    B, T, H = enc.shape
    Hh = w1t.shape[1]
    enc_row_bytes = T * H * 4
    Hp = _lane_pad(H, enc_row_bytes)
    Tp = _lane_pad(T, enc_row_bytes)
    Bb = batch_block
    grid = (pl.cdiv(B, Bb),)
    rep = lambda i: (0, 0)                      # weights: same block every step

    w1_bf16 = w1t.astype(jnp.bfloat16)          # MXU operand; halves weight DMA/VMEM

    out_pad, wts_pad = pl.pallas_call(
        self_attention_kernel,
        grid=grid,
        in_specs=[
            pl.BlockSpec((Bb, T, H), lambda i: (i, 0, 0)),
            pl.BlockSpec((H, Hh), rep),
            pl.BlockSpec((1, Hh), rep),
            pl.BlockSpec((1, Hh), rep),
            pl.BlockSpec(memory_space=pltpu.MemorySpace.SMEM),   # b2 scalar
        ],
        out_specs=(
            pl.BlockSpec((Bb, Hp), lambda i: (i, 0)),
            pl.BlockSpec((Bb, Tp), lambda i: (i, 0)),
        ),
        out_shape=(
            jax.ShapeDtypeStruct((B, Hp), jnp.float32),   # pooled outputs
            jax.ShapeDtypeStruct((B, Tp), jnp.float32),   # attention weights
        ),
        compiler_params=pltpu.CompilerParams(
            dimension_semantics=("parallel",),            # batch axis -> megacore
            vmem_limit_bytes=int(vmem_limit_bytes),
        ),
    )(enc, w1_bf16, b1, w2, b2)

    out = out_pad[:, :H] if Hp > H else out_pad
    wts = wts_pad[:, :T] if Tp > T else wts_pad
    return out, wts


def self_attention(enc, w1t, b1, w2, b2, *, batch_block=None, vmem_limit_bytes=None):
    B, T, H = enc.shape
    Hh = w1t.shape[1]
    if vmem_limit_bytes is None:
        vmem_limit_bytes = _pick_vmem_limit_bytes()
    if batch_block is None:
        enc_row_bytes = T * H * 4
        Hp = _lane_pad(H, enc_row_bytes)
        Tp = _lane_pad(T, enc_row_bytes)
        batch_block = _pick_batch_block(B, T, H, Hh, Hp, Tp, vmem_limit_bytes)
    return _self_attention_impl(enc, w1t, b1, w2, b2,
                                batch_block=int(batch_block),
                                vmem_limit_bytes=int(vmem_limit_bytes))


# ---------------------------- pure-JAX reference ------------------------------

def reference_self_attention(enc, w1t, b1, w2, b2):
    hid = jnp.maximum(enc @ w1t + b1, 0.0)                  # (B, T, Hh)
    energy = jnp.sum(hid * w2, axis=-1) + b2[0, 0]          # (B, T)
    weights = jax.nn.softmax(energy, axis=1)                # (B, T)
    outputs = jnp.sum(enc * weights[:, :, None], axis=1)    # (B, H)
    return outputs, weights


# ----------------------------------- main --------------------------------------

if __name__ == "__main__":
    B, T, H = 2, 8, 32          # batch, seq, hidden_dim
    Hh = H // 2

    key = jax.random.PRNGKey(0)
    k_enc, k_w1, k_b1, k_w2, k_b2 = jax.random.split(key, 5)

    enc = jax.random.normal(k_enc, (B, T, H), jnp.float32)
    # nn.Linear default init: U(-1/sqrt(fan_in), 1/sqrt(fan_in))
    bound1 = 1.0 / (H ** 0.5)
    w1t = jax.random.uniform(k_w1, (H, Hh), jnp.float32, -bound1, bound1)
    b1 = jax.random.uniform(k_b1, (1, Hh), jnp.float32, -bound1, bound1)
    bound2 = 1.0 / (Hh ** 0.5)
    w2 = jax.random.uniform(k_w2, (1, Hh), jnp.float32, -bound2, bound2)
    b2 = jax.random.uniform(k_b2, (1, 1), jnp.float32, -bound2, bound2)

    out, wts = self_attention(enc, w1t, b1, w2, b2)
    out, wts = jax.block_until_ready((out, wts))

    out_ref, wts_ref = reference_self_attention(enc, w1t, b1, w2, b2)
    # tolerance accounts for the bf16 MXU operands in the projection matmul
    # (f32 reference); softmax/pooling are exact f32.
    assert jnp.allclose(out, out_ref, atol=1e-2, rtol=1e-2), "outputs mismatch"
    assert jnp.allclose(wts, wts_ref, atol=1e-2, rtol=1e-2), "weights mismatch"

    print("KERNEL_OK")
</pallas_src>

<mosaic_0001>
module attributes {stable_mosaic.version = 11 : i64} {
  func.func @self_attention_kernel(%arg0: i32, %arg1: memref<2x8x32xf32, #tpu.memory_space<vmem>>, %arg2: memref<32x16xbf16, #tpu.memory_space<vmem>>, %arg3: memref<1x16xf32, #tpu.memory_space<vmem>>, %arg4: memref<1x16xf32, #tpu.memory_space<vmem>>, %arg5: memref<1x1xf32, #tpu.memory_space<smem>>, %arg6: memref<2x32xf32, #tpu.memory_space<vmem>>, %arg7: memref<2x8xf32, #tpu.memory_space<vmem>>) attributes {dimension_semantics = [#tpu.dimension_semantics<parallel>], iteration_bounds = array<i64: 1>, scalar_prefetch = 0 : i64, scratch_operands = 0 : i64, tpu.core_type = #tpu.core_type<tc>, window_params = [{transform_indices = @transform_0, window_bounds = array<i64: 2, 8, 32>}, {pipeline_mode = #tpu.pipeline_mode<synchronous>, transform_indices = @transform_1, window_bounds = array<i64: 32, 16>}, {pipeline_mode = #tpu.pipeline_mode<synchronous>, transform_indices = @transform_2, window_bounds = array<i64: 1, 16>}, {pipeline_mode = #tpu.pipeline_mode<synchronous>, transform_indices = @transform_3, window_bounds = array<i64: 1, 16>}, {transform_indices = @transform_4, window_bounds = array<i64: 1, 1>}, {transform_indices = @transform_5, window_bounds = array<i64: 2, 32>}, {transform_indices = @transform_6, window_bounds = array<i64: 2, 8>}]} {
    %c0 = arith.constant 0 : index
    %c0_0 = arith.constant 0 : index
    %c0_1 = arith.constant 0 : index
    %0 = vector.load %arg1[%c0, %c0_0, %c0_1] : memref<2x8x32xf32, #tpu.memory_space<vmem>>, vector<2x8x32xf32>
    %1 = vector.shape_cast %0 : vector<2x8x32xf32> to vector<16x32xf32>
    %2 = arith.truncf %1 : vector<16x32xf32> to vector<16x32xbf16>
    %c0_2 = arith.constant 0 : index
    %c0_3 = arith.constant 0 : index
    %3 = vector.load %arg2[%c0_2, %c0_3] : memref<32x16xbf16, #tpu.memory_space<vmem>>, vector<32x16xbf16>
    %cst = arith.constant dense<0.000000e+00> : vector<16x16xf32>
    %4 = tpu.matmul %2, %3, %cst {dimension_numbers = #tpu.dot_dimension_numbers<[1], [0], [0], [1], [0, 0, 1, 1], [], []>} : vector<16x32xbf16>, vector<32x16xbf16>, vector<16x16xf32> -> vector<16x16xf32>
    %c0_4 = arith.constant 0 : index
    %c0_5 = arith.constant 0 : index
    %5 = vector.load %arg3[%c0_4, %c0_5] : memref<1x16xf32, #tpu.memory_space<vmem>>, vector<1x16xf32>
    %6 = vector.broadcast %5 : vector<1x16xf32> to vector<16x16xf32>
    %7 = arith.addf %4, %6 : vector<16x16xf32>
    %cst_6 = arith.constant 0.000000e+00 : f32
    %8 = vector.broadcast %cst_6 : f32 to vector<16x16xf32>
    %9 = arith.maximumf %7, %8 : vector<16x16xf32>
    %10 = vector.shape_cast %9 : vector<16x16xf32> to vector<2x8x16xf32>
    %c0_7 = arith.constant 0 : index
    %c0_8 = arith.constant 0 : index
    %11 = vector.load %arg4[%c0_7, %c0_8] : memref<1x16xf32, #tpu.memory_space<vmem>>, vector<1x16xf32>
    %12 = vector.shape_cast %11 : vector<1x16xf32> to vector<1x1x16xf32>
    %13 = vector.broadcast %12 : vector<1x1x16xf32> to vector<2x8x16xf32>
    %14 = arith.mulf %10, %13 : vector<2x8x16xf32>
    %cst_9 = arith.constant dense<0.000000e+00> : vector<2x8xf32>
    %15 = vector.multi_reduction <add>, %14, %cst_9 [2] : vector<2x8x16xf32> to vector<2x8xf32>
    %c0_10 = arith.constant 0 : index
    %c0_11 = arith.constant 0 : index
    %16 = memref.load %arg5[%c0_10, %c0_11] : memref<1x1xf32, #tpu.memory_space<smem>>
    %17 = vector.broadcast %16 : f32 to vector<2x8xf32>
    %18 = arith.addf %15, %17 : vector<2x8xf32>
    %cst_12 = arith.constant dense<0xFF800000> : vector<2xf32>
    %19 = vector.multi_reduction <maximumf>, %18, %cst_12 [1] : vector<2x8xf32> to vector<2xf32>
    %20 = vector.shape_cast %19 : vector<2xf32> to vector<2x1xf32>
    %21 = vector.broadcast %20 : vector<2x1xf32> to vector<2x8xf32>
    %22 = arith.subf %18, %21 : vector<2x8xf32>
    %23 = math.exp %22 : vector<2x8xf32>
    %cst_13 = arith.constant dense<0.000000e+00> : vector<2xf32>
    %24 = vector.multi_reduction <add>, %23, %cst_13 [1] : vector<2x8xf32> to vector<2xf32>
    %25 = vector.shape_cast %24 : vector<2xf32> to vector<2x1xf32>
    %26 = vector.broadcast %25 : vector<2x1xf32> to vector<2x8xf32>
    %27 = arith.divf %23, %26 : vector<2x8xf32>
    %28 = vector.shape_cast %27 : vector<2x8xf32> to vector<2x1x8xf32>
    "tpu.trace_start"() <{level = 10 : i32, message = "bqt,bth->bqh"}> : () -> ()
    %cst_14 = arith.constant dense<0.000000e+00> : vector<2x1x32xf32>
    %29 = tpu.matmul %28, %0, %cst_14 {dimension_numbers = #tpu.dot_dimension_numbers<[2], [1], [1], [2], [0, 0, 0, 1, 1, 2], [0], [0]>} : vector<2x1x8xf32>, vector<2x8x32xf32>, vector<2x1x32xf32> -> vector<2x1x32xf32>
    "tpu.trace_stop"() : () -> ()
    %30 = vector.shape_cast %29 : vector<2x1x32xf32> to vector<2x32xf32>
    %c0_15 = arith.constant 0 : index
    %c0_16 = arith.constant 0 : index
    %31 = vector.load %arg6[%c0_15, %c0_16] : memref<2x32xf32, #tpu.memory_space<vmem>>, vector<2x32xf32>
    tpu.vector_store %arg6[%c0_15, %c0_16], %30 {strides = array<i32>} : memref<2x32xf32, #tpu.memory_space<vmem>>, vector<2x32xf32>,
    %c0_17 = arith.constant 0 : index
    %c0_18 = arith.constant 0 : index
    %32 = vector.load %arg7[%c0_17, %c0_18] : memref<2x8xf32, #tpu.memory_space<vmem>>, vector<2x8xf32>
    tpu.vector_store %arg7[%c0_17, %c0_18], %27 {strides = array<i32>} : memref<2x8xf32, #tpu.memory_space<vmem>>, vector<2x8xf32>,
    return
  }
  func.func @transform_0(%arg0: i32) -> (i32, i32, i32) {
    %c0_i32 = arith.constant 0 : i32
    %c0_i32_0 = arith.constant 0 : i32
    %c0_i32_1 = arith.constant 0 : i32
    return %arg0, %c0_i32, %c0_i32_0 : i32, i32, i32
  }
  func.func @transform_1(%arg0: i32) -> (i32, i32) {
    %c0_i32 = arith.constant 0 : i32
    %c0_i32_0 = arith.constant 0 : i32
    %c0_i32_1 = arith.constant 0 : i32
    return %c0_i32, %c0_i32_0 : i32, i32
  }
  func.func @transform_2(%arg0: i32) -> (i32, i32) {
    %c0_i32 = arith.constant 0 : i32
    %c0_i32_0 = arith.constant 0 : i32
    %c0_i32_1 = arith.constant 0 : i32
    return %c0_i32, %c0_i32_0 : i32, i32
  }
  func.func @transform_3(%arg0: i32) -> (i32, i32) {
    %c0_i32 = arith.constant 0 : i32
    %c0_i32_0 = arith.constant 0 : i32
    %c0_i32_1 = arith.constant 0 : i32
    return %c0_i32, %c0_i32_0 : i32, i32
  }
  func.func @transform_4(%arg0: i32) -> (i32, i32) {
    %c0_i32 = arith.constant 0 : i32
    %c0_i32_0 = arith.constant 0 : i32
    %c0_i32_1 = arith.constant 0 : i32
    return %c0_i32, %c0_i32_0 : i32, i32
  }
  func.func @transform_5(%arg0: i32) -> (i32, i32) {
    %c0_i32 = arith.constant 0 : i32
    %c0_i32_0 = arith.constant 0 : i32
    return %arg0, %c0_i32 : i32, i32
  }
  func.func @transform_6(%arg0: i32) -> (i32, i32) {
    %c0_i32 = arith.constant 0 : i32
    %c0_i32_0 = arith.constant 0 : i32
    return %arg0, %c0_i32 : i32, i32
  }
}

</mosaic_0001>

<llo_original>
// kernel: _self_attention_impl.1
$region0: #{_self_attention_impl.1}
  #allocation0 [shape = 'u32[]', space=smem, size = 0x4, offset = 0x4, fixed_abs, tag = 'smem constant byte address 0x4 - core index']
  #allocation1 [shape = 'u32[72,128]{1,0:T(1,128)}', space=vmem, size = 0x9000, scoped, tag = 'internal scratch']
  #allocation2 [shape = 'f32[1,1]{1,0:T(1,128)S(6)}', space=smem, size = 0x200, scoped, tag = 'scoped memory for _self_attention_impl.1']
  %s0 = inlined_call_operand.vmem [shape: f32[2,8,32], index: 0, kind: input, shape index: {}]
  %s1 = inlined_call_operand.vmem [shape: bf16[32,16], index: 1, kind: input, shape index: {}]
  %s2 = inlined_call_operand.vmem [shape: f32[1,16], index: 2, kind: input, shape index: {}]
  %s3 = inlined_call_operand.vmem [shape: f32[1,16], index: 3, kind: input, shape index: {}]
  %s4 = inlined_call_operand.<no memory space> [shape: f32[1,1], index: 4, kind: input, shape index: {}]
  %s5 = inlined_call_operand.hbm [shape: f32[2,32], index: 5, kind: output, shape index: {0}]
  %s6 = inlined_call_operand.hbm [shape: f32[2,8], index: 6, kind: output, shape index: {1}]
  %7 = xla_tuple %s5, %s6
  %s8 = sld [smem:[#allocation0]]
  $region38: #{_self_attention_impl.1} parent=0
    _
  %s10 = ssub.s32 1, %s8
  %s11 = scalar_select 0, %s10, %s8
  %12 = sst [smem:[#allocation2]] %s4
  $region1: #{_self_attention_impl.1} parent=0
    #allocation3 [shape = 'u8[1024]{0}', space=vmem, size = 0x400, scoped, tag = 'output window, operand 0, single buffered']
    #allocation4 [shape = 's32[1]{0}', space=sflag, size = 0x4, scoped, tag = 'scoped memory for _self_attention_impl.1']
    #allocation5 [shape = 'u8[1024]{0}', space=vmem, size = 0x400, scoped, tag = 'output window, operand 1, single buffered']
    #allocation6 [shape = 's32[1]{0}', space=sflag, size = 0x4, scoped, tag = 'scoped memory for _self_attention_impl.1']
    %13 = vsyncpa [#allocation4], 0
    %14 = vsyncpa [#allocation6], 0
    // Predicated region
    $region2: #{_self_attention_impl.1} parent=1 // pred_check
      _
    $region3: #{_self_attention_impl.1} parent=1 // pred_check_branch
      %16 = sbr.rel (0) target = $region5
    $region4: #{_self_attention_impl.1} parent=1 // pred_region
      _
    $region5: #{_self_attention_impl.1} parent=1 // pred_fallthru
      _
    // Predicated region
    $region6: #{_self_attention_impl.1} parent=1 // pred_check
      _
    $region7: #{_self_attention_impl.1} parent=1 // pred_check_branch
      %18 = sbr.rel (0) target = $region9
    $region8: #{_self_attention_impl.1} parent=1 // pred_region
      _
    $region9: #{_self_attention_impl.1} parent=1 // pred_fallthru
      _
    // Predicated region
    $region10: #{_self_attention_impl.1} parent=1 // pred_check
      _
    $region11: #{_self_attention_impl.1} parent=1 // pred_check_branch
      %20 = sbr.rel (0) target = $region13
    $region12: #{_self_attention_impl.1} parent=1 // pred_region
      _
    $region13: #{_self_attention_impl.1} parent=1 // pred_fallthru
      _
    // Predicated region
    $region14: #{_self_attention_impl.1} parent=1 // pred_check
      _
    $region15: #{_self_attention_impl.1} parent=1 // pred_check_branch
      %22 = sbr.rel (0) target = $region17
    $region16: #{_self_attention_impl.1} parent=1 // pred_region
      _
    $region17: #{_self_attention_impl.1} parent=1 // pred_fallthru
      _
    // Predicated region
    $region18: #{_self_attention_impl.1} parent=1 // pred_check
      _
    $region19: #{_self_attention_impl.1} parent=1 // pred_check_branch
      %24 = sbr.rel (0) target = $region21
    $region20: #{_self_attention_impl.1} parent=1 // pred_region
      _
    $region21: #{_self_attention_impl.1} parent=1 // pred_fallthru
      _
    %v26 = vld [vmem:[%s0] sm:$0xff]
    %v27 = vld [vmem:[%s0 + $0x8] sm:$0xff]
    %v28 = vpack.c.bf16 %v27, %v26
    %v29 = vld [vmem:[%s1] sm:$0xf]
    %v30 = vld [vmem:[%s1 + $0x4] sm:$0xf]
    %v31 = vld [vmem:[%s1 + $0x8] sm:$0xf]
    %v32 = vld [vmem:[%s1 + $0xc] sm:$0xf]
    %v33 = vld [vmem:[%s2] sm:$0x1]
    %v35 = vperm.slane %v33, 0
    %v41 = vunpack.c.l.b16 %v29
    %v42 = vunpack.c.l.b16 %v30
    %v43 = vunpack.c.l.b16 %v31
    %v44 = vunpack.c.l.b16 %v32
    %v45 = vpack.c.b16 %v42, %v41
    %v46 = vpack.c.b16 %v44, %v43
    %vm49 = vcmask 261120
    %v51 = vsel %vm49, %v28, 0
    %53 = vmatpush.bf16.msra.mxu0 0
    %54 = vmatpush.bf16.msra.mxu0 0
    %55 = vmatpush.bf16.msra.mxu0 0
    %56 = vmatpush.bf16.msra.mxu0 0
    %57 = vmatpush.bf16.msra.mxu0 0
    %58 = vmatpush.bf16.msra.mxu0 0
    %59 = vmatpush.bf16.msra.mxu0 %v46
    %60 = vmatpush.bf16.msra.mxu0 %v45
    %61 = vmatmul.bf16.gmra.mxu0 %v51
    %v62 = vpop.f32.mrf.mxu0
    %v63 = vadd.f32 %v35, %v62
    %v64 = vpop.f32.mrf.mxu0
    %v65 = vadd.f32 %v35, %v64
    %66 = vdwg.mxu0
    %v67 = vmax.f32 %v63, 0.0
    %v68 = vmax.f32 %v65, 0.0
    %v69 = vld [vmem:[%s3] sm:$0x1]
    %v71 = vperm.slane %v69, 0
    %v73 = vmul.f32 %v67, %v71
    %v74 = vmul.f32 %v68, %v71
    %vm75 = vcmask 130048
    %v76 = vsel %vm75, %v73, 0.0
    %77 = vadd.xlane.f32.xlu0 %v76
    %v78 = vpop.xlane.xlu0 %77
    %v79 = vsel %vm75, %v74, 0.0
    %80 = vadd.xlane.f32.xlu0 %v79
    %v81 = vpop.xlane.xlu0 %80
    %s82 = sld [smem:[#allocation2]]
    %v83 = vstv %s82
    %v84 = vadd.f32 %v78, %v83
    %v85 = vadd.f32 %v81, %v83
    %v88 = vlaneseq
    %v89 = vand.u32 %v88, 127
    %v90 = vperm.slane %v84, %v89
    %v91 = vperm.slane %v85, %v89
    %vm92 = vcmask 1041409
    %v93 = vsel %vm92, %v91, %v90
    %vm95 = vcmask 58368
    %v96 = vsel %vm95, %v93, -inf
    %97 = vmax.xlane.f32.xlu0 %v96
    %v98 = vpop.xlane.xlu0 %97
    %v100 = vperm.slane %v98, 0
    %v101 = vperm.slane %v98, 1
    %v104 = vsub.f32 %v84, %v100
    %v105 = vsub.f32 %v85, %v101
    %v106 = vmul.f32 %v104, 1.442695
    %v107 = vpow.pop %v106
    %v108 = vmul.f32 %v105, 1.442695
    %v109 = vpow.pop %v108
    %112 = vset.pattern.permute.xlu0 0
    %113 = vperm.xlu0 %112, %v107
    %v114 = vpop.permute.xlu0 %113
    %115 = vset.pattern.permute.xlu0 0
    %116 = vperm.xlu0 %115, %v109
    %v117 = vpop.permute.xlu0 %116
    %v118 = vperm.slane %v114, %v89
    %v119 = vperm.slane %v117, %v89
    %v120 = vsel %vm92, %v119, %v118
    %v122 = vsel %vm95, %v120, 0.0
    %123 = vadd.xlane.f32.xlu0 %v122
    %v124 = vpop.xlane.xlu0 %123
    %v126 = vperm.slane %v124, 0
    %v127 = vperm.slane %v124, 1
    %v130 = vrcp.pop %v126
    %v131 = vmul.f32 %v126, %v130
    %v132 = vsub.f32 1.0, %v131
    %v133 = vmul.f32 %v130, %v132
    %v134 = vadd.f32 %v130, %v133
    %vm135 = vweird.f32 %v126
    %vm136 = vweird.f32 %v130
    %vm137 = vmor %vm135, %vm136
    %v138 = vsel %vm137, %v130, %v134
    %v139 = vand.u32 2147483647, %v126
    %vm140 = vcmp.eq.f32.partialorder %v139, 8.507059e+37
    %v141 = vand.u32 %v126, 2147483648
    %v142 = vor.u32 1.1754944e-38, %v141
    %v143 = vsel %vm140, %v142, %v138
    %v144 = vmul.f32 %v107, %v143
    %v145 = vrcp.pop %v127
    %v146 = vmul.f32 %v127, %v145
    %v147 = vsub.f32 1.0, %v146
    %v148 = vmul.f32 %v145, %v147
    %v149 = vadd.f32 %v145, %v148
    %vm150 = vweird.f32 %v127
    %vm151 = vweird.f32 %v145
    %vm152 = vmor %vm150, %vm151
    %v153 = vsel %vm152, %v145, %v149
    %v154 = vand.u32 2147483647, %v127
    %vm155 = vcmp.eq.f32.partialorder %v154, 8.507059e+37
    %v156 = vand.u32 %v127, 2147483648
    %v157 = vor.u32 1.1754944e-38, %v156
    %v158 = vsel %vm155, %v157, %v153
    %v159 = vmul.f32 %v109, %v158
    %161 = vset.pattern.permute.xlu0 0
    %162 = vperm.xlu0 %161, %v144
    %v163 = vpop.permute.xlu0 %162
    %v164 = vperm.slane %v163, %v89
    %vm165 = vcmask 64512
    %v166 = vsel %vm165, %v164, 0
    %168 = vmatpush.msra.mxu0 0.0
    %169 = vmatpush.msra.mxu0 0.0
    %170 = vmatpush.msra.mxu0 0.0
    %171 = vmatpush.msra.mxu0 0.0
    %172 = vmatpush.msra.mxu0 0.0
    %173 = vmatpush.msra.mxu0 0.0
    %174 = vmatpush.msra.mxu0 0.0
    %175 = vmatpush.msra.mxu0 0.0
    %176 = vmatpush.msra.mxu0 0.0
    %177 = vmatpush.msra.mxu0 0.0
    %178 = vmatpush.msra.mxu0 0.0
    %179 = vmatpush.msra.mxu0 0.0
    %180 = vmatpush.msra.mxu0 0.0
    %181 = vmatpush.msra.mxu0 0.0
    %182 = vmatpush.msra.mxu0 0.0
    %183 = vmatpush.msra.mxu0 %v26
    %184 = vmatmul.f32.gmra.mxu0 %v166
    %v185 = vpop.f32.mrf.mxu0
    %v186 = vadd.f32 0.0, %v185
    %187 = vdwg.mxu0
    %189 = vset.pattern.permute.xlu0 0
    %190 = vperm.xlu0 %189, %v159
    %v191 = vpop.permute.xlu0 %190
    %v192 = vperm.slane %v191, %v89
    %v193 = vsel %vm165, %v192, 0
    %195 = vmatpush.msra.mxu0 0.0
    %196 = vmatpush.msra.mxu0 0.0
    %197 = vmatpush.msra.mxu0 0.0
    %198 = vmatpush.msra.mxu0 0.0
    %199 = vmatpush.msra.mxu0 0.0
    %200 = vmatpush.msra.mxu0 0.0
    %201 = vmatpush.msra.mxu0 0.0
    %202 = vmatpush.msra.mxu0 0.0
    %203 = vmatpush.msra.mxu0 0.0
    %204 = vmatpush.msra.mxu0 0.0
    %205 = vmatpush.msra.mxu0 0.0
    %206 = vmatpush.msra.mxu0 0.0
    %207 = vmatpush.msra.mxu0 0.0
    %208 = vmatpush.msra.mxu0 0.0
    %209 = vmatpush.msra.mxu0 0.0
    %210 = vmatpush.msra.mxu0 %v27
    %211 = vmatmul.f32.gmra.mxu0 %v193
    %v212 = vpop.f32.mrf.mxu0
    %v213 = vadd.f32 0.0, %v212
    %214 = vdwg.mxu0
    %v217 = vrot.slane %v213, 7
    %v218 = vsel %vm92, %v217, %v186
    %vm220 = vcmask 254976
    %221 = vst.msk [vmem:[#allocation3] sm:$0x3] %vm220, %v218
    %v222 = vsel %vm92, %v192, %v164
    %224 = vst.msk [vmem:[#allocation5] sm:$0x3] %vm95, %v222
    // Predicated region
    $region22: #{_self_attention_impl.1} parent=1 // pred_check
      _
    $region23: #{_self_attention_impl.1} parent=1 // pred_check_branch
      %226 = sbr.rel (0) target = $region25
    $region24: #{_self_attention_impl.1} parent=1 // pred_region
      %228 = vsyncadd [#allocation4], 0
      %s230 = sshll.u32 [#allocation3], 4
      %s231 = int_to_ptr.vmem [resolvable:$true] %s230
      %s232 = sshll.u32 %s5, 4
      %s233 = int_to_ptr.hbm [resolvable:$true] %s232
      %235 = dma.vmem_to_hbm [thread:$0]  %s231, 32, %s233, [#allocation4]
    $region25: #{_self_attention_impl.1} parent=1 // pred_fallthru
      _
    // Predicated region
    $region26: #{_self_attention_impl.1} parent=1 // pred_check
      _
    $region27: #{_self_attention_impl.1} parent=1 // pred_check_branch
      %237 = sbr.rel (0) target = $region29
    $region28: #{_self_attention_impl.1} parent=1 // pred_region
      %239 = vsyncadd [#allocation6], 0
      %s241 = sshll.u32 [#allocation5], 4
      %s242 = int_to_ptr.vmem [resolvable:$true] %s241
      %s243 = sshll.u32 %s6, 4
      %s244 = int_to_ptr.hbm [resolvable:$true] %s243
      %246 = dma.vmem_to_hbm [thread:$0]  %s242, 32, %s244, [#allocation6]
    $region29: #{_self_attention_impl.1} parent=1 // pred_fallthru
      _
    // Predicated region
    $region30: #{_self_attention_impl.1} parent=1 // pred_check
      _
    $region31: #{_self_attention_impl.1} parent=1 // pred_check_branch
      %248 = sbr.rel (0) target = $region33
    $region32: #{_self_attention_impl.1} parent=1 // pred_region
      %250 = dma.done [#allocation4], 32
    $region33: #{_self_attention_impl.1} parent=1 // pred_fallthru
      _
    // Predicated region
    $region34: #{_self_attention_impl.1} parent=1 // pred_check
      _
    $region35: #{_self_attention_impl.1} parent=1 // pred_check_branch
      %252 = sbr.rel (0) target = $region37
    $region36: #{_self_attention_impl.1} parent=1 // pred_region
      %254 = dma.done [#allocation6], 32
    $region37: #{_self_attention_impl.1} parent=1 // pred_fallthru
      _
    %255 = vsyncpa [#allocation4], 1
    %256 = vsyncpa [#allocation6], 1

</llo_original>
